<compile_context>
chip_gen: v6e
topology: v6e:2x2x1
jax: 0.10.0
libtpu: 0.0.40
codegen_flags: <defaults>
</compile_context>

<pallas_src>
import jax
import jax.numpy as jnp
from jax import lax
from jax.experimental import pallas as pl
from jax.experimental.pallas import tpu as pltpu


_INT32_MIN = int(jnp.iinfo(jnp.int32).min)
_QUERY_PAD_LABEL = _INT32_MIN        # never equals 0 or any real class id
_CLASS_PAD_ID = _INT32_MIN + 1       # never equals any query label (incl. the pad label)


def _proto_loss_kernel(cls_ref, b_ref, w_ref, qlab_ref, qry_ref, out_ref):
    """One query tile: delta = b - 2 q.w per class, accumulate six per-class sums."""
    t = pl.program_id(1)

    @pl.when(t == 0)
    def _init():
        out_ref[...] = jnp.zeros_like(out_ref)

    qry = qry_ref[...].astype(jnp.float32)       # [TQ, D] (bf16 stays bf16 on the wire)
    qlab = qlab_ref[...]                         # [TQ, 1] int32
    cls = cls_ref[...]                           # [1, C]  int32
    w = w_ref[...]                               # [C, D]  f32 : p_fg(c) - p_bg
    b = b_ref[...]                               # [1, C]  f32 : ||p_fg||^2 - ||p_bg||^2

    # Single MXU matmul per tile: [TQ, D] x [C, D]^T -> [TQ, C]
    qw = lax.dot_general(qry, w, (((1,), (1,)), ((), ())),
                         preferred_element_type=jnp.float32)
    delta = b - 2.0 * qw                         # d_fg - d_bg per class

    fg = (qlab == cls).astype(jnp.float32)                    # [TQ, C]
    bg = (qlab == jnp.zeros_like(cls)).astype(jnp.float32)    # [TQ, C]

    # 2-class log-softmax via softplus of the distance difference:
    #   lp_fg = -softplus(delta),  lp_bg = -softplus(-delta) = delta - softplus(delta)
    # (argument of the log is in (1, 2], so log(1+x) is accurate enough here.)
    sp = jnp.maximum(delta, 0.0) + jnp.log(1.0 + jnp.exp(-jnp.abs(delta)))
    lp_fg = -sp
    lp_bg = delta - sp
    pred_fg = (delta < 0.0).astype(jnp.float32)  # tie (delta == 0) -> background

    c = fg.shape[1]
    rows = jnp.concatenate([
        jnp.sum(lp_fg * fg, axis=0, keepdims=True),            # 0: sum log p_fg over fg
        jnp.sum(lp_bg * bg, axis=0, keepdims=True),            # 1: sum log p_bg over bg
        jnp.sum(pred_fg * fg, axis=0, keepdims=True),          # 2: fg correct count
        jnp.sum((1.0 - pred_fg) * bg, axis=0, keepdims=True),  # 3: bg correct count
        jnp.sum(fg, axis=0, keepdims=True),                    # 4: n_fg
        jnp.sum(bg, axis=0, keepdims=True),                    # 5: n_bg
        jnp.zeros((2, c), jnp.float32),                        # 6,7: tile padding rows
    ], axis=0)                                                 # [8, C]
    out_ref[...] += rows


def _vmem_capacity_bytes():
    """Per-generation VMEM capacity; conservative v7x-sized fallback if query fails."""
    try:
        info = pltpu.get_tpu_info()
        cap = getattr(info, "vmem_capacity_bytes", None)
        if cap:
            return int(cap)
    except Exception:
        pass
    return 64 * 1024 * 1024


def _prototype_w_b(spt, y_spt, class_ids):
    """(w, b) of the distance-difference identity, per class. Tiny; left to XLA."""
    spt = spt.astype(jnp.float32)
    y = y_spt.astype(jnp.int32).reshape(-1)
    m_bg = (y == 0).astype(jnp.float32)                               # [Ns]
    n_bg = jnp.maximum(jnp.sum(m_bg), 1.0)   # guard: reference would NaN on empty class
    p_bg = (m_bg @ spt) / n_bg                                        # [D]
    m_fg = (y[None, :] == class_ids[:, None]).astype(jnp.float32)     # [C, Ns]
    n_fg = jnp.maximum(jnp.sum(m_fg, axis=1, keepdims=True), 1.0)     # [C, 1]
    p_fg = (m_fg @ spt) / n_fg                                        # [C, D]
    w = p_fg - p_bg[None, :]                                          # [C, D]
    b = jnp.sum(p_fg * p_fg, axis=1) - jnp.sum(p_bg * p_bg)           # [C]
    return w, b


def prototypical_loss_pallas_multi(spt_output, y_spt, qry_output, y_qry, class_ids,
                                   *, tq_cap=None):
    """Batched variant: per-class (loss, acc_fg, acc_bg) for every id in class_ids."""
    class_ids = jnp.asarray(class_ids, dtype=jnp.int32).reshape(-1)
    C = int(class_ids.shape[0])
    Ns, D = spt_output.shape
    Nq, Dq = qry_output.shape
    if D != Dq:
        raise ValueError("feature dims of support and query must match")

    # --- prototypes -> (w, b), lane-padded class axis for the MXU ---
    w, b = _prototype_w_b(spt_output, y_spt, class_ids)
    c_pad = max(128, ((C + 127) // 128) * 128)
    w_pad = jnp.zeros((c_pad, D), jnp.float32).at[:C, :].set(w)
    b_pad = jnp.zeros((1, c_pad), jnp.float32).at[0, :C].set(b)
    cls_pad = jnp.full((1, c_pad), _CLASS_PAD_ID, jnp.int32).at[0, :C].set(class_ids)

    # --- query tile size from the per-generation VMEM budget ---
    vmem_cap = _vmem_capacity_bytes()
    in_bytes = jnp.dtype(qry_output.dtype).itemsize
    # double-buffered qry tile + label column + in-kernel f32 copy + [TQ, c_pad] temporaries
    per_row = 2 * D * in_bytes + 2 * 4 + 4 * D + 6 * 4 * c_pad
    budget = vmem_cap // 4
    tq = int(min(max(budget // per_row, 8), 2048))
    if tq_cap is not None:
        tq = min(tq, int(tq_cap))
    tq = max(8, (tq // 8) * 8)
    tq = min(tq, ((Nq + 7) // 8) * 8)

    num_tiles = -(-Nq // tq)
    n_splits = 2 if num_tiles >= 2 else 1          # v7x: feed the second TensorCore
    tiles_per_split = -(-num_tiles // n_splits)
    total_tiles = n_splits * tiles_per_split
    # Re-derive tq so the split adds at most a near-empty step (no full padded tile).
    tq = max(8, ((-(-Nq // total_tiles) + 7) // 8) * 8)
    nq_pad = total_tiles * tq

    qry = qry_output
    qlab = y_qry.astype(jnp.int32).reshape(Nq, 1)
    if nq_pad != Nq:
        qry = jnp.pad(qry, ((0, nq_pad - Nq), (0, 0)))
        qlab = jnp.pad(qlab, ((0, nq_pad - Nq), (0, 0)),
                       constant_values=_QUERY_PAD_LABEL)

    partial = pl.pallas_call(
        _proto_loss_kernel,
        out_shape=jax.ShapeDtypeStruct((n_splits * 8, c_pad), jnp.float32),
        grid=(n_splits, tiles_per_split),
        in_specs=[
            pl.BlockSpec((1, c_pad), lambda s, t: (0, 0)),   # class ids (grid-invariant)
            pl.BlockSpec((1, c_pad), lambda s, t: (0, 0)),   # b
            pl.BlockSpec((c_pad, D), lambda s, t: (0, 0)),   # w
            pl.BlockSpec((tq, 1), lambda s, t: (s * tiles_per_split + t, 0)),  # labels
            pl.BlockSpec((tq, D), lambda s, t: (s * tiles_per_split + t, 0)),  # queries
        ],
        out_specs=pl.BlockSpec((8, c_pad), lambda s, t: (s, 0)),
        compiler_params=pltpu.CompilerParams(
            dimension_semantics=("parallel", "arbitrary"),
            vmem_limit_bytes=int(min(vmem_cap * 3 // 4, 96 * 1024 * 1024)),
        ),
    )(cls_pad, b_pad, w_pad, qlab, qry)

    # Tiny 2-way split reduction + normalization finish in XLA.
    sums = jnp.sum(partial.reshape(n_splits, 8, c_pad), axis=0)[:, :C]   # rows 0..5 used
    n_fg = jnp.maximum(sums[4], 1.0)     # guard: reference is undefined for empty classes
    n_bg = jnp.maximum(sums[5], 1.0)
    loss = -(sums[0] / n_fg) - (sums[1] / n_bg)
    acc_fg = sums[2] / n_fg
    acc_bg = sums[3] / n_bg
    return loss, acc_fg, acc_bg


def prototypical_loss_pallas(spt_output, y_spt, qry_output, y_qry, class_id, *, tq_cap=None):
    """Pallas equivalent of prototypical_loss(spt_output, y_spt, qry_output, y_qry, class_id)."""
    loss, acc_fg, acc_bg = prototypical_loss_pallas_multi(
        spt_output, y_spt, qry_output, y_qry, [int(class_id)], tq_cap=tq_cap)
    return loss[0], acc_fg[0], acc_bg[0]


class PrototypicalLoss:
    """Mirror of the PyTorch Module; the forward delegates to prototypical_loss."""

    def __init__(self, n_support):
        self.n_support = n_support  # kept for parity; the reference loss doesn't use it

    def __call__(self, spt_output, y_spt, qry_output, y_qry, class_id):
        return prototypical_loss_pallas(spt_output, y_spt, qry_output, y_qry, class_id)


def _reference_jax(spt, y_spt, qry, y_qry, class_id):
    """Plain-JAX re-implementation of the torch reference for a sanity check."""
    classes = jnp.array([0.0, float(class_id)])
    protos = []
    for c in classes:
        m = (y_spt.astype(jnp.float32) == c).astype(jnp.float32)
        protos.append(jnp.sum(spt.astype(jnp.float32) * m[:, None], axis=0) / jnp.sum(m))
    protos = jnp.stack(protos)                                     # [2, D]

    def log_p(samples):
        d = jnp.sum((samples[:, None, :] - protos[None, :, :]) ** 2, axis=2)
        logits = -d
        return logits - jax.scipy.special.logsumexp(logits, axis=1, keepdims=True)

    fg = qry[y_qry == class_id].astype(jnp.float32)
    bg = qry[y_qry == 0].astype(jnp.float32)
    lp_fg = log_p(fg)
    lp_bg = log_p(bg)
    loss = -jnp.mean(lp_fg[:, 1]) + -jnp.mean(lp_bg[:, 0])
    acc_fg = jnp.mean((jnp.argmax(lp_fg, axis=1) == 1).astype(jnp.float32))
    acc_bg = jnp.mean((jnp.argmax(lp_bg, axis=1) == 0).astype(jnp.float32))
    return loss, acc_fg, acc_bg


if __name__ == "__main__":
    key = jax.random.PRNGKey(0)
    k1, k2, k3, k4, k5 = jax.random.split(key, 5)

    # --- small episode (single tile, single split) ---
    Ns, Nq, D = 8, 8, 32
    class_id = 3
    spt_output = jax.random.normal(k1, (Ns, D), dtype=jnp.float32)
    qry_output = jax.random.normal(k2, (Nq, D), dtype=jnp.float32)
    y_spt = jnp.array([0, 0, 0, 0, class_id, class_id, class_id, class_id], dtype=jnp.int32)
    y_qry = jnp.array([0, class_id, 0, class_id, 0, class_id, 0, class_id], dtype=jnp.int32)

    loss_mod = PrototypicalLoss(n_support=4)
    loss, acc_fg, acc_bg = loss_mod(spt_output, y_spt, qry_output, y_qry, class_id)
    jax.block_until_ready((loss, acc_fg, acc_bg))

    ref_loss, ref_afg, ref_abg = _reference_jax(spt_output, y_spt, qry_output, y_qry, class_id)
    assert jnp.allclose(loss, ref_loss, atol=1e-4, rtol=1e-4), (loss, ref_loss)
    assert jnp.allclose(acc_fg, ref_afg, atol=1e-6), (acc_fg, ref_afg)
    assert jnp.allclose(acc_bg, ref_abg, atol=1e-6), (acc_bg, ref_abg)

    # --- larger episode: multi-tile grid, 2-way parallel split, padding, ignored labels ---
    Ns2, Nq2, D2 = 24, 5000, 64
    spt2 = jax.random.normal(k3, (Ns2, D2), dtype=jnp.float32)
    qry2 = jax.random.normal(k4, (Nq2, D2), dtype=jnp.float32)
    y_spt2 = jnp.array([0, 5, 7], dtype=jnp.int32)[jnp.arange(Ns2) % 3]
    # query labels in {0, 5, 7, 9}: queries labeled 9 match neither class -> excluded
    y_qry2 = jax.random.choice(k5, jnp.array([0, 5, 7, 9], dtype=jnp.int32), shape=(Nq2,))

    loss2, afg2, abg2 = prototypical_loss_pallas(spt2, y_spt2, qry2, y_qry2, 5, tq_cap=1024)
    jax.block_until_ready((loss2, afg2, abg2))
    r_loss2, r_afg2, r_abg2 = _reference_jax(spt2, y_spt2, qry2, y_qry2, 5)
    assert jnp.allclose(loss2, r_loss2, atol=1e-3, rtol=1e-3), (loss2, r_loss2)
    assert jnp.allclose(afg2, r_afg2, atol=3e-3), (afg2, r_afg2)
    assert jnp.allclose(abg2, r_abg2, atol=3e-3), (abg2, r_abg2)

    # --- batched class_ids: one [TQ,D]x[D,C] matmul amortizes the query HBM reads ---
    lossv, afgv, abgv = prototypical_loss_pallas_multi(
        spt2, y_spt2, qry2, y_qry2, [5, 7], tq_cap=1024)
    jax.block_until_ready((lossv, afgv, abgv))
    for i, cid in enumerate((5, 7)):
        r_l, r_a, r_b = _reference_jax(spt2, y_spt2, qry2, y_qry2, cid)
        assert jnp.allclose(lossv[i], r_l, atol=1e-3, rtol=1e-3), (cid, lossv[i], r_l)
        assert jnp.allclose(afgv[i], r_a, atol=3e-3), (cid, afgv[i], r_a)
        assert jnp.allclose(abgv[i], r_b, atol=3e-3), (cid, abgv[i], r_b)

    print("KERNEL_OK")
</pallas_src>

<mosaic_0001>
module attributes {stable_mosaic.version = 11 : i64} {
  func.func @_proto_loss_kernel(%arg0: i32, %arg1: i32, %arg2: memref<1x128xi32, #tpu.memory_space<vmem>>, %arg3: memref<1x128xf32, #tpu.memory_space<vmem>>, %arg4: memref<128x32xf32, #tpu.memory_space<vmem>>, %arg5: memref<8x1xi32, #tpu.memory_space<vmem>>, %arg6: memref<8x32xf32, #tpu.memory_space<vmem>>, %arg7: memref<8x128xf32, #tpu.memory_space<vmem>>) attributes {dimension_semantics = [#tpu.dimension_semantics<parallel>, #tpu.dimension_semantics<arbitrary>], iteration_bounds = array<i64: 1, 1>, scalar_prefetch = 0 : i64, scratch_operands = 0 : i64, tpu.core_type = #tpu.core_type<tc>, window_params = [{pipeline_mode = #tpu.pipeline_mode<synchronous>, transform_indices = @transform_0, window_bounds = array<i64: 1, 128>}, {pipeline_mode = #tpu.pipeline_mode<synchronous>, transform_indices = @transform_1, window_bounds = array<i64: 1, 128>}, {pipeline_mode = #tpu.pipeline_mode<synchronous>, transform_indices = @transform_2, window_bounds = array<i64: 128, 32>}, {transform_indices = @transform_3, window_bounds = array<i64: 8, 1>}, {transform_indices = @transform_4, window_bounds = array<i64: 8, 32>}, {transform_indices = @transform_5, window_bounds = array<i64: 8, 128>}]} {
    %c0_i32 = arith.constant 0 : i32
    %0 = arith.cmpi eq, %arg1, %c0_i32 : i32
    %1 = arith.extui %0 : i1 to i32
    %c0_i32_0 = arith.constant 0 : i32
    %2 = arith.cmpi ne, %1, %c0_i32_0 : i32
    scf.if %2 {
      %cst_29 = arith.constant 0.000000e+00 : f32
      %64 = vector.broadcast %cst_29 : f32 to vector<8x128xf32>
      %c0_30 = arith.constant 0 : index
      %c0_31 = arith.constant 0 : index
      %65 = vector.load %arg7[%c0_30, %c0_31] : memref<8x128xf32, #tpu.memory_space<vmem>>, vector<8x128xf32>
      tpu.vector_store %arg7[%c0_30, %c0_31], %64 {strides = array<i32>} : memref<8x128xf32, #tpu.memory_space<vmem>>, vector<8x128xf32>,
    } else {
    }
    %c0 = arith.constant 0 : index
    %c0_1 = arith.constant 0 : index
    %3 = vector.load %arg6[%c0, %c0_1] : memref<8x32xf32, #tpu.memory_space<vmem>>, vector<8x32xf32>
    %c0_2 = arith.constant 0 : index
    %c0_3 = arith.constant 0 : index
    %4 = vector.load %arg5[%c0_2, %c0_3] : memref<8x1xi32, #tpu.memory_space<vmem>>, vector<8x1xi32>
    %c0_4 = arith.constant 0 : index
    %c0_5 = arith.constant 0 : index
    %5 = vector.load %arg2[%c0_4, %c0_5] : memref<1x128xi32, #tpu.memory_space<vmem>>, vector<1x128xi32>
    %c0_6 = arith.constant 0 : index
    %c0_7 = arith.constant 0 : index
    %6 = vector.load %arg4[%c0_6, %c0_7] : memref<128x32xf32, #tpu.memory_space<vmem>>, vector<128x32xf32>
    %c0_8 = arith.constant 0 : index
    %c0_9 = arith.constant 0 : index
    %7 = vector.load %arg3[%c0_8, %c0_9] : memref<1x128xf32, #tpu.memory_space<vmem>>, vector<1x128xf32>
    %cst = arith.constant dense<0.000000e+00> : vector<8x128xf32>
    %8 = tpu.matmul %3, %6, %cst {dimension_numbers = #tpu.dot_dimension_numbers<[1], [1], [0], [0], [0, 0, 1, 0], [], []>} : vector<8x32xf32>, vector<128x32xf32>, vector<8x128xf32> -> vector<8x128xf32>
    %cst_10 = arith.constant 2.000000e+00 : f32
    %9 = vector.broadcast %cst_10 : f32 to vector<8x128xf32>
    %10 = arith.mulf %9, %8 : vector<8x128xf32>
    %11 = vector.broadcast %7 : vector<1x128xf32> to vector<8x128xf32>
    %12 = arith.subf %11, %10 : vector<8x128xf32>
    %13 = vector.broadcast %4 : vector<8x1xi32> to vector<8x128xi32>
    %14 = vector.broadcast %5 : vector<1x128xi32> to vector<8x128xi32>
    %15 = arith.cmpi eq, %13, %14 : vector<8x128xi32>
    %16 = arith.extui %15 : vector<8x128xi1> to vector<8x128xi32>
    %17 = arith.sitofp %16 : vector<8x128xi32> to vector<8x128xf32>
    %c0_i32_11 = arith.constant 0 : i32
    %18 = vector.broadcast %c0_i32_11 : i32 to vector<1x128xi32>
    %19 = vector.broadcast %4 : vector<8x1xi32> to vector<8x128xi32>
    %20 = vector.broadcast %18 : vector<1x128xi32> to vector<8x128xi32>
    %21 = arith.cmpi eq, %19, %20 : vector<8x128xi32>
    %22 = arith.extui %21 : vector<8x128xi1> to vector<8x128xi32>
    %23 = arith.sitofp %22 : vector<8x128xi32> to vector<8x128xf32>
    %cst_12 = arith.constant 0.000000e+00 : f32
    %24 = vector.broadcast %cst_12 : f32 to vector<8x128xf32>
    %25 = arith.maximumf %12, %24 : vector<8x128xf32>
    %26 = math.absf %12 : vector<8x128xf32>
    %cst_13 = arith.constant 0.000000e+00 : f32
    %27 = vector.broadcast %cst_13 : f32 to vector<8x128xf32>
    %28 = arith.subf %27, %26 : vector<8x128xf32>
    %29 = math.exp %28 : vector<8x128xf32>
    %cst_14 = arith.constant 1.000000e+00 : f32
    %30 = vector.broadcast %cst_14 : f32 to vector<8x128xf32>
    %31 = arith.addf %30, %29 : vector<8x128xf32>
    %32 = math.log %31 : vector<8x128xf32>
    %33 = arith.addf %25, %32 : vector<8x128xf32>
    %cst_15 = arith.constant 0.000000e+00 : f32
    %34 = vector.broadcast %cst_15 : f32 to vector<8x128xf32>
    %35 = arith.subf %34, %33 : vector<8x128xf32>
    %36 = arith.subf %12, %33 : vector<8x128xf32>
    %cst_16 = arith.constant 0.000000e+00 : f32
    %37 = vector.broadcast %cst_16 : f32 to vector<8x128xf32>
    %38 = arith.cmpf olt, %12, %37 : vector<8x128xf32>
    %39 = arith.extui %38 : vector<8x128xi1> to vector<8x128xi32>
    %40 = arith.sitofp %39 : vector<8x128xi32> to vector<8x128xf32>
    %41 = arith.mulf %35, %17 : vector<8x128xf32>
    %cst_17 = arith.constant dense<0.000000e+00> : vector<128xf32>
    %42 = vector.multi_reduction <add>, %41, %cst_17 [0] : vector<8x128xf32> to vector<128xf32>
    %43 = vector.shape_cast %42 : vector<128xf32> to vector<1x128xf32>
    %44 = arith.mulf %36, %23 : vector<8x128xf32>
    %cst_18 = arith.constant dense<0.000000e+00> : vector<128xf32>
    %45 = vector.multi_reduction <add>, %44, %cst_18 [0] : vector<8x128xf32> to vector<128xf32>
    %46 = vector.shape_cast %45 : vector<128xf32> to vector<1x128xf32>
    %47 = arith.mulf %40, %17 : vector<8x128xf32>
    %cst_19 = arith.constant dense<0.000000e+00> : vector<128xf32>
    %48 = vector.multi_reduction <add>, %47, %cst_19 [0] : vector<8x128xf32> to vector<128xf32>
    %49 = vector.shape_cast %48 : vector<128xf32> to vector<1x128xf32>
    %cst_20 = arith.constant 1.000000e+00 : f32
    %50 = vector.broadcast %cst_20 : f32 to vector<8x128xf32>
    %51 = arith.subf %50, %40 : vector<8x128xf32>
    %52 = arith.mulf %51, %23 : vector<8x128xf32>
    %cst_21 = arith.constant dense<0.000000e+00> : vector<128xf32>
    %53 = vector.multi_reduction <add>, %52, %cst_21 [0] : vector<8x128xf32> to vector<128xf32>
    %54 = vector.shape_cast %53 : vector<128xf32> to vector<1x128xf32>
    %cst_22 = arith.constant dense<0.000000e+00> : vector<128xf32>
    %55 = vector.multi_reduction <add>, %17, %cst_22 [0] : vector<8x128xf32> to vector<128xf32>
    %56 = vector.shape_cast %55 : vector<128xf32> to vector<1x128xf32>
    %cst_23 = arith.constant dense<0.000000e+00> : vector<128xf32>
    %57 = vector.multi_reduction <add>, %23, %cst_23 [0] : vector<8x128xf32> to vector<128xf32>
    %58 = vector.shape_cast %57 : vector<128xf32> to vector<1x128xf32>
    %cst_24 = arith.constant 0.000000e+00 : f32
    %59 = vector.broadcast %cst_24 : f32 to vector<2x128xf32>
    %60 = tpu.concatenate %43, %46, %49, %54, %56, %58, %59 in 0 : vector<1x128xf32>, vector<1x128xf32>, vector<1x128xf32>, vector<1x128xf32>, vector<1x128xf32>, vector<1x128xf32>, vector<2x128xf32> -> vector<8x128xf32>
    %c0_25 = arith.constant 0 : index
    %c0_26 = arith.constant 0 : index
    %61 = vector.load %arg7[%c0_25, %c0_26] : memref<8x128xf32, #tpu.memory_space<vmem>>, vector<8x128xf32>
    %62 = arith.addf %61, %60 : vector<8x128xf32>
    %c0_27 = arith.constant 0 : index
    %c0_28 = arith.constant 0 : index
    %63 = vector.load %arg7[%c0_27, %c0_28] : memref<8x128xf32, #tpu.memory_space<vmem>>, vector<8x128xf32>
    tpu.vector_store %arg7[%c0_27, %c0_28], %62 {strides = array<i32>} : memref<8x128xf32, #tpu.memory_space<vmem>>, vector<8x128xf32>,
    return
  }
  func.func @transform_0(%arg0: i32, %arg1: i32) -> (i32, i32) {
    %c0_i32 = arith.constant 0 : i32
    %c0_i32_0 = arith.constant 0 : i32
    %c0_i32_1 = arith.constant 0 : i32
    return %c0_i32, %c0_i32_0 : i32, i32
  }
  func.func @transform_1(%arg0: i32, %arg1: i32) -> (i32, i32) {
    %c0_i32 = arith.constant 0 : i32
    %c0_i32_0 = arith.constant 0 : i32
    %c0_i32_1 = arith.constant 0 : i32
    return %c0_i32, %c0_i32_0 : i32, i32
  }
  func.func @transform_2(%arg0: i32, %arg1: i32) -> (i32, i32) {
    %c0_i32 = arith.constant 0 : i32
    %c0_i32_0 = arith.constant 0 : i32
    %c0_i32_1 = arith.constant 0 : i32
    return %c0_i32, %c0_i32_0 : i32, i32
  }
  func.func @transform_3(%arg0: i32, %arg1: i32) -> (i32, i32) {
    %c1_i32 = arith.constant 1 : i32
    %0 = arith.muli %arg0, %c1_i32 : i32
    %1 = arith.addi %0, %arg1 : i32
    %c0_i32 = arith.constant 0 : i32
    %c0_i32_0 = arith.constant 0 : i32
    return %1, %c0_i32 : i32, i32
  }
  func.func @transform_4(%arg0: i32, %arg1: i32) -> (i32, i32) {
    %c1_i32 = arith.constant 1 : i32
    %0 = arith.muli %arg0, %c1_i32 : i32
    %1 = arith.addi %0, %arg1 : i32
    %c0_i32 = arith.constant 0 : i32
    %c0_i32_0 = arith.constant 0 : i32
    return %1, %c0_i32 : i32, i32
  }
  func.func @transform_5(%arg0: i32, %arg1: i32) -> (i32, i32) {
    %c0_i32 = arith.constant 0 : i32
    %c0_i32_0 = arith.constant 0 : i32
    return %arg0, %c0_i32 : i32, i32
  }
}

</mosaic_0001>

<llo_original>
// kernel: tpu_custom_call.1
$region0: #{tpu_custom_call.1}
  #allocation0 [shape = 'u32[]', space=smem, size = 0x4, offset = 0x4, fixed_abs, tag = 'smem constant byte address 0x4 - core index']
  #allocation1 [shape = 'u32[144,128]{1,0:T(1,128)}', space=vmem, size = 0x12000, scoped, tag = 'internal scratch']
  %s0 = inlined_call_operand.vmem [shape: s32[1,128], index: 0, kind: input, shape index: {}]
  %s1 = inlined_call_operand.vmem [shape: f32[1,128], index: 1, kind: input, shape index: {}]
  %s2 = inlined_call_operand.vmem [shape: f32[128,32], index: 2, kind: input, shape index: {}]
  %s3 = inlined_call_operand.vmem [shape: s32[8,1], index: 3, kind: input, shape index: {}]
  %s4 = inlined_call_operand.vmem [shape: f32[8,32], index: 4, kind: input, shape index: {}]
  %s5 = inlined_call_operand.hbm [shape: f32[8,128], index: 5, kind: output, shape index: {}]
  %s6 = sld [smem:[#allocation0]]
  $region34: #{tpu_custom_call.1} parent=0
    _
  %s8 = ssub.s32 1, %s6
  %s9 = scalar_select 0, %s8, %s6
  $region1: #{tpu_custom_call.1} parent=0
    #allocation2 [shape = 'u8[4096]{0}', space=vmem, size = 0x1000, scoped, tag = 'output window, operand 0, single buffered']
    #allocation3 [shape = 's32[1]{0}', space=sflag, size = 0x4, scoped, tag = 'scoped memory for tpu_custom_call.1']
    %10 = vsyncpa [#allocation3], 0
    // Predicated region
    $region2: #{tpu_custom_call.1} parent=1 // pred_check
      _
    $region3: #{tpu_custom_call.1} parent=1 // pred_check_branch
      %12 = sbr.rel (0) target = $region5
    $region4: #{tpu_custom_call.1} parent=1 // pred_region
      _
    $region5: #{tpu_custom_call.1} parent=1 // pred_fallthru
      _
    // Predicated region
    $region6: #{tpu_custom_call.1} parent=1 // pred_check
      _
    $region7: #{tpu_custom_call.1} parent=1 // pred_check_branch
      %14 = sbr.rel (0) target = $region9
    $region8: #{tpu_custom_call.1} parent=1 // pred_region
      _
    $region9: #{tpu_custom_call.1} parent=1 // pred_fallthru
      _
    // Predicated region
    $region10: #{tpu_custom_call.1} parent=1 // pred_check
      _
    $region11: #{tpu_custom_call.1} parent=1 // pred_check_branch
      %16 = sbr.rel (0) target = $region13
    $region12: #{tpu_custom_call.1} parent=1 // pred_region
      _
    $region13: #{tpu_custom_call.1} parent=1 // pred_fallthru
      _
    // Predicated region
    $region14: #{tpu_custom_call.1} parent=1 // pred_check
      _
    $region15: #{tpu_custom_call.1} parent=1 // pred_check_branch
      %18 = sbr.rel (0) target = $region17
    $region16: #{tpu_custom_call.1} parent=1 // pred_region
      %s19 = sadd.s32 0, 0
      %p20 = scmp.lt.s32.totalorder %s19, 0
      %s21 = scalar_select %p20, %s19, 0
      %s22 = smul.addr %s21, 8
      %s23 = scalar_lea.vmem %s3, %s22
      %s24 = sadd.s32 0, 0
    $region17: #{tpu_custom_call.1} parent=1 // pred_fallthru
      _
    // Predicated region
    $region18: #{tpu_custom_call.1} parent=1 // pred_check
      _
    $region19: #{tpu_custom_call.1} parent=1 // pred_check_branch
      %26 = sbr.rel (0) target = $region21
    $region20: #{tpu_custom_call.1} parent=1 // pred_region
      %s27 = sadd.s32 0, 0
      %p28 = scmp.lt.s32.totalorder %s27, 0
      %s29 = scalar_select %p28, %s27, 0
      %s30 = smul.addr %s29, 8
      %s31 = scalar_lea.vmem %s4, %s30
      %s32 = sadd.s32 0, 0
    $region21: #{tpu_custom_call.1} parent=1 // pred_fallthru
      _
    %s33 = sadd.s32 0, 0
    %p34 = scmp.lt.s32.totalorder %s33, 0
    %s35 = scalar_select %p34, %s33, 0
    %s36 = smul.addr %s35, 8
    %s37 = scalar_lea.vmem %s3, %s36
    %s38 = sadd.s32 0, 0
    %p39 = scmp.lt.s32.totalorder %s38, 0
    %s40 = scalar_select %p39, %s38, 0
    %s41 = smul.addr %s40, 8
    %s42 = scalar_lea.vmem %s4, %s41
    %s43 = sadd.s32 0, 0
    %p44 = scmp.lt.s32.totalorder %s43, 0
    %s45 = scalar_select %p44, %s43, 0
    %s46 = smul.addr %s45, 8
    %s47 = scalar_lea.vmem %s3, %s46
    %s48 = sadd.s32 0, 0
    %s49 = sadd.s32 0, 0
    %p50 = scmp.lt.s32.totalorder %s49, 0
    %s51 = scalar_select %p50, %s49, 0
    %s52 = smul.addr %s51, 8
    %s53 = scalar_lea.vmem %s4, %s52
    %s54 = sadd.s32 0, 0
    %p55 = scmp.eq.s32.totalorder 0, 0
    // Predicated region
    $region22: #{tpu_custom_call.1} parent=1 // pred_check
      %p56 = pneg %p55
    $region23: #{tpu_custom_call.1} parent=1 // pred_check_branch
      %58 = sbr.rel (%p56) target = $region25
    $region24: #{tpu_custom_call.1} parent=1 // pred_region
      %59 = vst [vmem:[#allocation2] sm:$0xff] 0.0
    $region25: #{tpu_custom_call.1} parent=1 // pred_fallthru
      _
    %v60 = vld [vmem:[%s53] sm:$0xff]
    %v61 = vld [vmem:[%s47] sm:$0xff]
    %v62 = vld [vmem:[%s0] sm:$0x1]
    %v63 = vld [vmem:[%s2] sm:$0xff]
    %v64 = vld [vmem:[%s2 + $0x8] sm:$0xff]
    %v65 = vld [vmem:[%s2 + $0x10] sm:$0xff]
    %v66 = vld [vmem:[%s2 + $0x18] sm:$0xff]
    %v67 = vld [vmem:[%s2 + $0x20] sm:$0xff]
    %v68 = vld [vmem:[%s2 + $0x28] sm:$0xff]
    %v69 = vld [vmem:[%s2 + $0x30] sm:$0xff]
    %v70 = vld [vmem:[%s2 + $0x38] sm:$0xff]
    %v71 = vld [vmem:[%s2 + $0x40] sm:$0xff]
    %v72 = vld [vmem:[%s2 + $0x48] sm:$0xff]
    %v73 = vld [vmem:[%s2 + $0x50] sm:$0xff]
    %v74 = vld [vmem:[%s2 + $0x58] sm:$0xff]
    %v75 = vld [vmem:[%s2 + $0x60] sm:$0xff]
    %v76 = vld [vmem:[%s2 + $0x68] sm:$0xff]
    %v77 = vld [vmem:[%s2 + $0x70] sm:$0xff]
    %v78 = vld [vmem:[%s2 + $0x78] sm:$0xff]
    %v79 = vld [vmem:[%s1] sm:$0x1]
    %vm80 = vcmask 261120
    %v82 = vsel %vm80, %v60, 0
    %v85 = vsel %vm80, %v63, 0
    %v88 = vsel %vm80, %v64, 0
    %v91 = vsel %vm80, %v65, 0
    %v94 = vsel %vm80, %v66, 0
    %v97 = vsel %vm80, %v67, 0
    %v100 = vsel %vm80, %v68, 0
    %v103 = vsel %vm80, %v69, 0
    %v106 = vsel %vm80, %v70, 0
    %v109 = vsel %vm80, %v71, 0
    %v112 = vsel %vm80, %v72, 0
    %v115 = vsel %vm80, %v73, 0
    %v118 = vsel %vm80, %v74, 0
    %v121 = vsel %vm80, %v75, 0
    %v124 = vsel %vm80, %v76, 0
    %v127 = vsel %vm80, %v77, 0
    %v130 = vsel %vm80, %v78, 0
    %132 = vmatprep.subr.mxu0 0.0
    %133 = vmatpush1.xpose.msra.mxu0 %v130
    %134 = vmatprep.subr.mxu0 0.0
    %135 = vmatpush1.xpose.msra.mxu0 %v127
    %136 = vmatprep.subr.mxu0 0.0
    %137 = vmatpush1.xpose.msra.mxu0 %v124
    %138 = vmatprep.subr.mxu0 0.0
    %139 = vmatpush1.xpose.msra.mxu0 %v121
    %140 = vmatprep.subr.mxu0 0.0
    %141 = vmatpush1.xpose.msra.mxu0 %v118
    %142 = vmatprep.subr.mxu0 0.0
    %143 = vmatpush1.xpose.msra.mxu0 %v115
    %144 = vmatprep.subr.mxu0 0.0
    %145 = vmatpush1.xpose.msra.mxu0 %v112
    %146 = vmatprep.subr.mxu0 0.0
    %147 = vmatpush1.xpose.msra.mxu0 %v109
    %148 = vmatprep.subr.mxu0 0.0
    %149 = vmatpush1.xpose.msra.mxu0 %v106
    %150 = vmatprep.subr.mxu0 0.0
    %151 = vmatpush1.xpose.msra.mxu0 %v103
    %152 = vmatprep.subr.mxu0 0.0
    %153 = vmatpush1.xpose.msra.mxu0 %v100
    %154 = vmatprep.subr.mxu0 0.0
    %155 = vmatpush1.xpose.msra.mxu0 %v97
    %156 = vmatprep.subr.mxu0 0.0
    %157 = vmatpush1.xpose.msra.mxu0 %v94
    %158 = vmatprep.subr.mxu0 0.0
    %159 = vmatpush1.xpose.msra.mxu0 %v91
    %160 = vmatprep.subr.mxu0 0.0
    %161 = vmatpush1.xpose.msra.mxu0 %v88
    %162 = vmatprep.subr.mxu0 0.0
    %163 = vmatpush1.xpose.msra.mxu0 %v85
    %164 = vmatprep.subr.mxu0 0.0
    %165 = vmatpush2.xpose.msra.mxu0 0.0
    %166 = vmatprep.subr.mxu0 0.0
    %167 = vmatpush2.xpose.msra.mxu0 0.0
    %168 = vmatprep.subr.mxu0 0.0
    %169 = vmatpush2.xpose.msra.mxu0 0.0
    %170 = vmatprep.subr.mxu0 0.0
    %171 = vmatpush2.xpose.msra.mxu0 0.0
    %172 = vmatprep.subr.mxu0 0.0
    %173 = vmatpush2.xpose.msra.mxu0 0.0
    %174 = vmatprep.subr.mxu0 0.0
    %175 = vmatpush2.xpose.msra.mxu0 0.0
    %176 = vmatprep.subr.mxu0 0.0
    %177 = vmatpush2.xpose.msra.mxu0 0.0
    %178 = vmatprep.subr.mxu0 0.0
    %179 = vmatpush2.xpose.msra.mxu0 0.0
    %180 = vmatprep.subr.mxu0 0.0
    %181 = vmatpush2.xpose.msra.mxu0 0.0
    %182 = vmatprep.subr.mxu0 0.0
    %183 = vmatpush2.xpose.msra.mxu0 0.0
    %184 = vmatprep.subr.mxu0 0.0
    %185 = vmatpush2.xpose.msra.mxu0 0.0
    %186 = vmatprep.subr.mxu0 0.0
    %187 = vmatpush2.xpose.msra.mxu0 0.0
    %188 = vmatprep.subr.mxu0 0.0
    %189 = vmatpush2.xpose.msra.mxu0 0.0
    %190 = vmatprep.subr.mxu0 0.0
    %191 = vmatpush2.xpose.msra.mxu0 0.0
    %192 = vmatprep.subr.mxu0 0.0
    %193 = vmatpush2.xpose.msra.mxu0 0.0
    %194 = vmatprep.subr.mxu0 0.0
    %195 = vmatpush2.xpose.msra.mxu0 0.0
    %196 = vmatprep.mubr.f32.mxu0 0.0
    %197 = vmatmul.mubr.f32.gmra.mxu0 %v82
    %v198 = vpop.f32.mrf.mxu0
    %v199 = vadd.f32 0.0, %v198
    %v200 = vpop.f32.mrf.mxu0
    %201 = vdwg.mxu0
    %v202 = vmul.f32 %v199, 2.0
    %v204 = vlaneseq
    %v205 = vshrl.u32 %v204, 7
    %v206 = vsub.s32 0, %v205
    %v207 = vrot.slane %v79, %v206
    %v209 = vsub.f32 %v207, %v202
    %210 = vset.pattern.permute.xlu0 0
    %211 = vperm.xlu0 %210, %v61
    %v212 = vpop.permute.xlu0 %211
    %v213 = vlaneseq
    %v214 = vshrl.u32 %v213, 7
    %v215 = vsub.s32 0, %v214
    %v216 = vrot.slane %v62, %v215
    %vm217 = vcmp.eq.s32.totalorder %v212, %v216
    %v218 = vsel %vm217, 1, 0
    %v219 = vcvt.s32.f32 %v218
    %vm220 = vcmp.eq.s32.totalorder %v212, 0
    %v221 = vsel %vm220, 1, 0
    %v222 = vcvt.s32.f32 %v221
    %v223 = vmax.f32 %v209, 0.0
    %v224 = vand.u32 2147483647, %v209
    %v225 = vsub.f32 0.0, %v224
    %v226 = vmul.f32 %v225, 1.442695
    %v227 = vpow.pop %v226
    %v228 = vadd.f32 %v227, 1.0
    %v229 = vlog2.pop %v228
    %v230 = vmul.f32 %v229, 0.6931472
    %v231 = vadd.f32 %v223, %v230
    %v232 = vsub.f32 0.0, %v231
    %v233 = vsub.f32 %v209, %v231
    %vm234 = vcmp.lt.f32.partialorder %v209, 0.0
    %v235 = vsel %vm234, 1, 0
    %v236 = vcvt.s32.f32 %v235
    %v237 = vmul.f32 %v232, %v219
    %v238 = vrot.slane %v237, 4
    %v239 = vadd.f32 %v237, %v238
    %v240 = vrot.slane %v239, 2
    %v241 = vadd.f32 %v239, %v240
    %v242 = vrot.slane %v241, 1
    %v243 = vadd.f32 %v241, %v242
    %v244 = vmul.f32 %v233, %v222
    %v245 = vrot.slane %v244, 4
    %v246 = vadd.f32 %v244, %v245
    %v247 = vrot.slane %v246, 2
    %v248 = vadd.f32 %v246, %v247
    %v249 = vrot.slane %v248, 1
    %v250 = vadd.f32 %v248, %v249
    %v251 = vmul.f32 %v236, %v219
    %v252 = vrot.slane %v251, 4
    %v253 = vadd.f32 %v251, %v252
    %v254 = vrot.slane %v253, 2
    %v255 = vadd.f32 %v253, %v254
    %v256 = vrot.slane %v255, 1
    %v257 = vadd.f32 %v255, %v256
    %v258 = vsub.f32 1.0, %v236
    %v259 = vmul.f32 %v258, %v222
    %v260 = vrot.slane %v259, 4
    %v261 = vadd.f32 %v259, %v260
    %v262 = vrot.slane %v261, 2
    %v263 = vadd.f32 %v261, %v262
    %v264 = vrot.slane %v263, 1
    %v265 = vadd.f32 %v263, %v264
    %v266 = vrot.slane %v219, 4
    %v267 = vadd.f32 %v219, %v266
    %v268 = vrot.slane %v267, 2
    %v269 = vadd.f32 %v267, %v268
    %v270 = vrot.slane %v269, 1
    %v271 = vadd.f32 %v269, %v270
    %v272 = vrot.slane %v222, 4
    %v273 = vadd.f32 %v222, %v272
    %v274 = vrot.slane %v273, 2
    %v275 = vadd.f32 %v273, %v274
    %v276 = vrot.slane %v275, 1
    %v277 = vadd.f32 %v275, %v276
    %vm278 = vcmask 1040384
    %v279 = vsel %vm278, %v243, %v250
    %vm280 = vcmask 1041408
    %v281 = vsel %vm280, %v279, %v257
    %vm282 = vcmask 1042432
    %v283 = vsel %vm282, %v281, %v265
    %vm284 = vcmask 1043456
    %v285 = vsel %vm284, %v283, %v271
    %vm286 = vcmask 1044480
    %v287 = vsel %vm286, %v285, %v277
    %vm288 = vcmask 1045504
    %v289 = vsel %vm288, %v287, 0.0
    %v290 = vld [vmem:[#allocation2] sm:$0xff]
    %v291 = vadd.f32 %v290, %v289
    %292 = vst [vmem:[#allocation2] sm:$0xff] %v291
    // Predicated region
    $region26: #{tpu_custom_call.1} parent=1 // pred_check
      _
    $region27: #{tpu_custom_call.1} parent=1 // pred_check_branch
      %294 = sbr.rel (0) target = $region29
    $region28: #{tpu_custom_call.1} parent=1 // pred_region
      %s296 = ssub.s32 128, 128
      %297 = vsyncadd [#allocation3], %s296
      %s299 = sshll.u32 [#allocation2], 4
      %s300 = int_to_ptr.vmem [resolvable:$true] %s299
      %302 = dma.vmem_to_hbm [thread:$0]  %s300, 128, %s5, [#allocation3]
    $region29: #{tpu_custom_call.1} parent=1 // pred_fallthru
      _
    // Predicated region
    $region30: #{tpu_custom_call.1} parent=1 // pred_check
      _
    $region31: #{tpu_custom_call.1} parent=1 // pred_check_branch
      %304 = sbr.rel (0) target = $region33
    $region32: #{tpu_custom_call.1} parent=1 // pred_region
      %305 = dma.done [#allocation3], 128
    $region33: #{tpu_custom_call.1} parent=1 // pred_fallthru
      _
    %306 = vsyncpa [#allocation3], 1

</llo_original>
